<compile_context>
chip_gen: v7x
topology: tpu7x:2x2x1
jax: 0.10.0
libtpu: 0.0.40
codegen_flags: <defaults>
</compile_context>

<pallas_src>
import functools

import jax
import jax.numpy as jnp
from jax import lax
from jax.experimental import pallas as pl
from jax.experimental.pallas import tpu as pltpu

_LANE = 128      # lane width (last dim alignment)
_SUBLANE = 8     # f32 sublane alignment (second-to-last dim)


def _round_up(x: int, m: int) -> int:
    return (x + m - 1) // m * m


def _pick_tile(padded_dim: int, align: int, max_tile: int) -> int:
    """Largest multiple of `align` that divides `padded_dim` and is <= max_tile."""
    best = align
    t = align
    limit = min(padded_dim, max_tile)
    while t <= limit:
        if padded_dim % t == 0:
            best = t
        t += align
    return best


# ----------------------------------------------------------------------------
# Kernels
# ----------------------------------------------------------------------------
def _linear_kernel_f32(x_ref, w_ref, b_ref, o_ref):
    """f32 output: accumulate directly into the K-resident output block."""
    kk = pl.program_id(2)

    @pl.when(kk == 0)
    def _init():
        o_ref[...] = jnp.broadcast_to(b_ref[...], o_ref.shape).astype(o_ref.dtype)

    # x tile (tm, tk) @ W^T tile (tk, tn) -> (tm, tn); plain A@B, no transpose.
    o_ref[...] += jnp.dot(x_ref[...], w_ref[...],
                          preferred_element_type=jnp.float32)


def _linear_kernel_acc(x_ref, w_ref, b_ref, o_ref, acc_ref):
    """Low-precision output: f32 scratch accumulator, cast on the last K step."""
    kk = pl.program_id(2)

    @pl.when(kk == 0)
    def _init():
        acc_ref[...] = jnp.broadcast_to(b_ref[...].astype(jnp.float32),
                                        acc_ref.shape)

    acc_ref[...] += jnp.dot(x_ref[...], w_ref[...],
                            preferred_element_type=jnp.float32)

    @pl.when(kk == pl.num_programs(2) - 1)
    def _fin():
        o_ref[...] = acc_ref[...].astype(o_ref.dtype)


# ----------------------------------------------------------------------------
# One-time parameter preparation (hoist out of the per-step forward)
# ----------------------------------------------------------------------------
def prepare_linear_params(weight, bias, *, compute_dtype=None):
    """weight: (out, in) PyTorch layout, bias: (out,).

    Returns (w_t, b_row): W transposed to (in, out) and zero-padded so both
    dims are multiples of 128, bias as an f32 (1, Np) row. Do this once and
    cache it; only x is padded per forward call.
    """
    out_f, in_f = weight.shape
    k_p = _round_up(in_f, _LANE)
    n_p = _round_up(out_f, _LANE)

    w_t = weight.T                                       # (in, out)
    if (k_p != in_f) or (n_p != out_f):
        w_t = jnp.pad(w_t, ((0, k_p - in_f), (0, n_p - out_f)))
    if compute_dtype is not None:
        w_t = w_t.astype(compute_dtype)

    b_row = bias if n_p == out_f else jnp.pad(bias, (0, n_p - out_f))
    b_row = b_row.astype(jnp.float32).reshape(1, n_p)
    return w_t, b_row


# ----------------------------------------------------------------------------
# Forward
# ----------------------------------------------------------------------------
@functools.partial(
    jax.jit, static_argnames=("out_features", "max_tm", "max_tn", "max_tk"))
def linear_forward_prepared(x, w_t, b_row, *, out_features,
                            max_tm=512, max_tn=512, max_tk=1024):
    """x: (batch, in). w_t/b_row from prepare_linear_params."""
    batch, in_f = x.shape
    k_p, n_p = w_t.shape
    out_dtype = x.dtype            # module output stays in the input dtype

    # ---- divisor-aware tile selection (trace-time Python) ------------------
    m_p = _round_up(batch, _SUBLANE)
    tm = _pick_tile(m_p, _SUBLANE, max_tm)
    tn = _pick_tile(n_p, _LANE, max_tn)
    tk = _pick_tile(k_p, _LANE, max_tk)

    # v7x megacore: keep >= 2 parallel grid iterations when the problem allows.
    if (m_p // tm) * (n_p // tn) < 2:
        if tm >= 2 * _SUBLANE and (tm // 2) % _SUBLANE == 0:
            tm //= 2
        elif tn >= 2 * _LANE and (tn // 2) % _LANE == 0:
            tn //= 2

    # ---- per-call padding of x only (skipped when already aligned) ---------
    x_c = x if x.dtype == w_t.dtype else x.astype(w_t.dtype)
    pad_m, pad_k = m_p - batch, k_p - in_f
    if pad_m or pad_k:
        x_c = jnp.pad(x_c, ((0, pad_m), (0, pad_k)))

    grid = (m_p // tm, n_p // tn, k_p // tk)

    if out_dtype == jnp.float32:
        kernel, scratch = _linear_kernel_f32, []
    else:
        kernel, scratch = _linear_kernel_acc, [pltpu.VMEM((tm, tn), jnp.float32)]

    isz = lambda d: jnp.dtype(d).itemsize
    vmem_need = (2 * (tm * tk * isz(x_c.dtype) + tk * tn * isz(w_t.dtype)
                      + tn * 4 + tm * tn * isz(out_dtype))
                 + tm * tn * 4)
    vmem_limit = int(min(max(32 << 20, vmem_need + (4 << 20)), 64 << 20))

    cost = pl.CostEstimate(
        flops=2 * batch * in_f * out_features,
        transcendentals=0,
        bytes_accessed=(batch * in_f * isz(x.dtype)
                        + k_p * n_p * isz(w_t.dtype)
                        + n_p * 4
                        + batch * out_features * isz(out_dtype)),
    )

    y_p = pl.pallas_call(
        kernel,
        out_shape=jax.ShapeDtypeStruct((m_p, n_p), out_dtype),
        grid_spec=pltpu.PrefetchScalarGridSpec(
            num_scalar_prefetch=0,
            grid=grid,
            in_specs=[
                pl.BlockSpec((tm, tk), lambda i, j, kk: (i, kk)),   # x
                pl.BlockSpec((tk, tn), lambda i, j, kk: (kk, j)),   # W^T (in,out)
                pl.BlockSpec((1, tn), lambda i, j, kk: (0, j)),     # bias row
            ],
            out_specs=pl.BlockSpec((tm, tn), lambda i, j, kk: (i, j)),
            scratch_shapes=scratch,
        ),
        compiler_params=pltpu.CompilerParams(
            dimension_semantics=("parallel", "parallel", "arbitrary"),
            vmem_limit_bytes=vmem_limit,
        ),
        cost_estimate=cost,
    )(x_c, w_t, b_row)

    if (m_p, n_p) == (batch, out_features):
        return y_p
    return y_p[:batch, :out_features]


def linear_forward(x, weight, bias, **kwargs):
    """Convenience path (prep runs every call). Prefer prepare_linear_params
    once + linear_forward_prepared in a training/inference loop."""
    w_t, b_row = prepare_linear_params(weight, bias)
    return linear_forward_prepared(x, w_t, b_row,
                                   out_features=weight.shape[0], **kwargs)


# ----------------------------------------------------------------------------
# Self-test
# ----------------------------------------------------------------------------
if __name__ == "__main__":
    def init_params(kw, kb, in_f, out_f):
        # Mimic nn.Linear default init: uniform(-1/sqrt(in), 1/sqrt(in)).
        bound = 1.0 / (in_f ** 0.5)
        w = jax.random.uniform(kw, (out_f, in_f), jnp.float32, -bound, bound)
        b = jax.random.uniform(kb, (out_f,), jnp.float32, -bound, bound)
        return w, b

    def check(x, w, b, atol, rtol):
        w_t, b_row = prepare_linear_params(w, b)          # one-time prep
        y = jax.block_until_ready(
            linear_forward_prepared(x, w_t, b_row, out_features=w.shape[0]))
        y_ref = jnp.dot(x, w.T, precision=lax.Precision.HIGHEST) + b
        assert y.shape == y_ref.shape, (y.shape, y_ref.shape)
        err = float(jnp.max(jnp.abs(y - y_ref)))
        assert jnp.allclose(y, y_ref, atol=atol, rtol=rtol), f"max abs err {err}"

    ks = jax.random.split(jax.random.PRNGKey(0), 6)

    # 1) Classic linear-regression shape from the tutorial: 1 feature -> 1 out.
    w1, b1 = init_params(ks[0], ks[1], 1, 1)
    x1 = jax.random.normal(ks[2], (32, 1), jnp.float32)
    check(x1, w1, b1, atol=2e-3, rtol=1e-2)

    # 2) Small multi-feature case (module demo scale).
    w2, b2 = init_params(ks[3], ks[4], 4, 2)
    x2 = jax.random.normal(ks[5], (8, 4), jnp.float32)
    check(x2, w2, b2, atol=2e-3, rtol=1e-2)

    # 3) A shape exercising the full M/N/K grid with zero N/K padding
    #    (out=384 -> tn=384, in=1024 -> tk=1024, batch=256 -> tm=128, grid (2,1,1)).
    kx3, kw3, kb3 = jax.random.split(jax.random.PRNGKey(1), 3)
    w3, b3 = init_params(kw3, kb3, 1024, 384)
    x3 = jax.random.normal(kx3, (256, 1024), jnp.float32)
    check(x3, w3, b3, atol=2e-3, rtol=1e-2)

    print("KERNEL_OK")
</pallas_src>

<mosaic_0001>
module attributes {stable_mosaic.version = 11 : i64} {
  func.func @_linear_kernel_f32(%arg0: i32, %arg1: i32, %arg2: i32, %arg3: memref<16x128xf32, #tpu.memory_space<vmem>>, %arg4: memref<128x128xf32, #tpu.memory_space<vmem>>, %arg5: memref<1x128xf32, #tpu.memory_space<vmem>>, %arg6: memref<16x128xf32, #tpu.memory_space<vmem>>) attributes {dimension_semantics = [#tpu.dimension_semantics<parallel>, #tpu.dimension_semantics<parallel>, #tpu.dimension_semantics<arbitrary>], iteration_bounds = array<i64: 2, 1, 1>, scalar_prefetch = 0 : i64, scratch_operands = 0 : i64, tpu.core_type = #tpu.core_type<tc>, window_params = [{transform_indices = @transform_0, window_bounds = array<i64: 16, 128>}, {transform_indices = @transform_1, window_bounds = array<i64: 128, 128>}, {transform_indices = @transform_2, window_bounds = array<i64: 1, 128>}, {transform_indices = @transform_3, window_bounds = array<i64: 16, 128>}]} {
    %c0_i32 = arith.constant 0 : i32
    %0 = arith.cmpi eq, %arg2, %c0_i32 : i32
    %1 = arith.extui %0 : i1 to i32
    %c0_i32_0 = arith.constant 0 : i32
    %2 = arith.cmpi ne, %1, %c0_i32_0 : i32
    scf.if %2 {
      %c0_8 = arith.constant 0 : index
      %c0_9 = arith.constant 0 : index
      %9 = vector.load %arg5[%c0_8, %c0_9] : memref<1x128xf32, #tpu.memory_space<vmem>>, vector<1x128xf32>
      %10 = vector.shape_cast %9 : vector<1x128xf32> to vector<1x128xf32>
      %11 = vector.broadcast %10 : vector<1x128xf32> to vector<16x128xf32>
      %c0_10 = arith.constant 0 : index
      %c0_11 = arith.constant 0 : index
      %12 = vector.load %arg6[%c0_10, %c0_11] : memref<16x128xf32, #tpu.memory_space<vmem>>, vector<16x128xf32>
      tpu.vector_store %arg6[%c0_10, %c0_11], %11 {strides = array<i32>} : memref<16x128xf32, #tpu.memory_space<vmem>>, vector<16x128xf32>,
    } else {
    }
    %c0 = arith.constant 0 : index
    %c0_1 = arith.constant 0 : index
    %3 = vector.load %arg6[%c0, %c0_1] : memref<16x128xf32, #tpu.memory_space<vmem>>, vector<16x128xf32>
    %c0_2 = arith.constant 0 : index
    %c0_3 = arith.constant 0 : index
    %4 = vector.load %arg3[%c0_2, %c0_3] : memref<16x128xf32, #tpu.memory_space<vmem>>, vector<16x128xf32>
    %c0_4 = arith.constant 0 : index
    %c0_5 = arith.constant 0 : index
    %5 = vector.load %arg4[%c0_4, %c0_5] : memref<128x128xf32, #tpu.memory_space<vmem>>, vector<128x128xf32>
    %cst = arith.constant dense<0.000000e+00> : vector<16x128xf32>
    %6 = tpu.matmul %4, %5, %cst {dimension_numbers = #tpu.dot_dimension_numbers<[1], [0], [0], [1], [0, 0, 1, 1], [], []>} : vector<16x128xf32>, vector<128x128xf32>, vector<16x128xf32> -> vector<16x128xf32>
    %7 = arith.addf %3, %6 : vector<16x128xf32>
    %c0_6 = arith.constant 0 : index
    %c0_7 = arith.constant 0 : index
    %8 = vector.load %arg6[%c0_6, %c0_7] : memref<16x128xf32, #tpu.memory_space<vmem>>, vector<16x128xf32>
    tpu.vector_store %arg6[%c0_6, %c0_7], %7 {strides = array<i32>} : memref<16x128xf32, #tpu.memory_space<vmem>>, vector<16x128xf32>,
    return
  }
  func.func @transform_0(%arg0: i32, %arg1: i32, %arg2: i32) -> (i32, i32) {
    %c0_i32 = arith.constant 0 : i32
    return %arg0, %arg2 : i32, i32
  }
  func.func @transform_1(%arg0: i32, %arg1: i32, %arg2: i32) -> (i32, i32) {
    %c0_i32 = arith.constant 0 : i32
    return %arg2, %arg1 : i32, i32
  }
  func.func @transform_2(%arg0: i32, %arg1: i32, %arg2: i32) -> (i32, i32) {
    %c0_i32 = arith.constant 0 : i32
    %c0_i32_0 = arith.constant 0 : i32
    return %c0_i32, %arg1 : i32, i32
  }
  func.func @transform_3(%arg0: i32, %arg1: i32, %arg2: i32) -> (i32, i32) {
    %c0_i32 = arith.constant 0 : i32
    return %arg0, %arg1 : i32, i32
  }
}

</mosaic_0001>

<llo_original>
// kernel: linear_forward_prepared.1
$region0: #{linear_forward_prepared.1}
  #allocation0 [shape = 'u32[]', space=smem, size = 0x4, offset = 0x4, fixed_abs, tag = 'smem constant byte address 0x4 - core index']
  #allocation1 [shape = 'u32[144,128]{1,0:T(1,128)}', space=vmem, size = 0x12000, scoped, tag = 'internal scratch']
  %s0 = inlined_call_operand.vmem [shape: f32[32,128], index: 0, kind: input, shape index: {}]
  %s1 = inlined_call_operand.hbm [shape: f32[128,128], index: 1, kind: input, shape index: {}]
  %s2 = inlined_call_operand.vmem [shape: f32[1,128], index: 2, kind: input, shape index: {}]
  %s3 = inlined_call_operand.vmem [shape: f32[32,128], index: 3, kind: output, shape index: {}]
  %s4 = sld [smem:[#allocation0]]
  $region53: #{linear_forward_prepared.1} parent=0
    _
  %s6 = ssub.s32 1, %s4
  %s7 = scalar_select 0, %s6, %s4
  $region1: #{linear_forward_prepared.1} parent=0
    #allocation2 [shape = 'u8[65536]{0}', space=vmem, size = 0x10000, scoped, tag = 'input window, operand 1, single buffered']
    #allocation3 [shape = 's32[2]{0}', space=sflag, size = 0x8, scoped, tag = 'scoped memory for linear_forward_prepared.1']
    %8 = vsyncpa [#allocation3], 0
    loop: start=0, step=1, limit=4
    $region2: #{linear_forward_prepared.1} parent=1 // loop_pre_header
      _
    $region3: #{linear_forward_prepared.1} parent=1 // loop_header
      %s10 = sphi 0, %s14
      %p11 = scmp.ge.s32.totalorder %s10, 4
      %s17 = sphi 0, %s36
      %s18 = sphi 0, %s32
      %s19 = sphi 0, %s28
      %s20 = sphi 0, %s17
      %s21 = sphi 0, %s18
      %s22 = sphi 0, %s19
      %s23 = sphi 0, %s20
      %s24 = sphi 0, %s21
      %s25 = sphi 0, %s22
      %s41 = sphi 0, %s43
      %s44 = sphi 0, %s41
      %s45 = sphi 0, %s44
      %s61 = sphi 0, %s45
      %s69 = sphi 0, %s71
      %s72 = sphi 0, %s69
      %s73 = sphi 0, %s72
      %s89 = sphi 0, %s73
      %s95 = sphi 0, %s97
      %s98 = sphi 0, %s95
      %s99 = sphi 0, %s98
      %s115 = sphi 0, %s99
      %s123 = sphi 0, %s125
      %s126 = sphi 0, %s123
      %s127 = sphi 0, %s126
      %s143 = sphi 0, %s127
    $region4: #{linear_forward_prepared.1} parent=1 // loop_header_branch
      %13 = sbr.rel (%p11) target = $region8
    $region5: #{linear_forward_prepared.1} parent=1 // loop_body
      %s15 = ssub.s32 %s10, 1
      %s16 = ssub.s32 %s10, 2
      %s26 = sadd.s32 1, %s19
      %p27 = scmp.ge.s32.totalorder %s26, 1
      %s28 = scalar_select %p27, 0, %s26
      %s29 = sadd.s32 1, %s18
      %s30 = scalar_select %p27, %s29, %s18
      %p31 = scmp.ge.s32.totalorder %s30, 1
      %s32 = scalar_select %p31, 0, %s30
      %s33 = sadd.s32 1, %s17
      %s34 = scalar_select %p31, %s33, %s17
      %p35 = scmp.ge.s32.totalorder %s34, 2
      %s36 = scalar_select %p35, 0, %s34
      %s37 = ssub.s32 %s17, %s36
      %s38 = ssub.s32 %s19, %s28
      %s39 = sor.u32 %s37, %s38
      %p40 = scmp.eq.s32.totalorder %s39, 0
      %s42 = sadd.s32 %s41, 1
      %s43 = scalar_select %p40, %s41, %s42
      %p46 = pneg %p40
      %p47 = scmp.eq.s32.totalorder %s10, 1
      %p48 = por %p46, %p47
      %p49 = scmp.ne.s32.totalorder %s41, %s44
      %p50 = scmp.eq.s32.totalorder %s10, 0
      %p51 = por %p49, %p50
      %p52 = scmp.ne.s32.totalorder %s41, %s44
      %p53 = scmp.eq.s32.totalorder %s15, 1
      %p54 = por %p52, %p53
      %p55 = scmp.ne.s32.totalorder %s44, %s45
      %p56 = scmp.eq.s32.totalorder %s15, 0
      %p57 = por %p55, %p56
      %p58 = scmp.ne.s32.totalorder %s44, %s45
      %p59 = scmp.eq.s32.totalorder %s16, 1
      %p60 = por %p58, %p59
      %p62 = scmp.ne.s32.totalorder %s45, %s61
      %p63 = scmp.eq.s32.totalorder %s16, 0
      %p64 = por %p62, %p63
      %s65 = ssub.s32 %s19, %s28
      %s66 = ssub.s32 %s18, %s32
      %s67 = sor.u32 %s65, %s66
      %p68 = scmp.eq.s32.totalorder %s67, 0
      %s70 = sadd.s32 %s69, 1
      %s71 = scalar_select %p68, %s69, %s70
      %p74 = pneg %p68
      %p75 = scmp.eq.s32.totalorder %s10, 1
      %p76 = por %p74, %p75
      %p77 = scmp.ne.s32.totalorder %s69, %s72
      %p78 = scmp.eq.s32.totalorder %s10, 0
      %p79 = por %p77, %p78
      %p80 = scmp.ne.s32.totalorder %s69, %s72
      %p81 = scmp.eq.s32.totalorder %s15, 1
      %p82 = por %p80, %p81
      %p83 = scmp.ne.s32.totalorder %s72, %s73
      %p84 = scmp.eq.s32.totalorder %s15, 0
      %p85 = por %p83, %p84
      %p86 = scmp.ne.s32.totalorder %s72, %s73
      %p87 = scmp.eq.s32.totalorder %s16, 1
      %p88 = por %p86, %p87
      %p90 = scmp.ne.s32.totalorder %s73, %s89
      %p91 = scmp.eq.s32.totalorder %s16, 0
      %p92 = por %p90, %p91
      %s93 = ssub.s32 %s18, %s32
      %p94 = scmp.eq.s32.totalorder %s93, 0
      %s96 = sadd.s32 %s95, 1
      %s97 = scalar_select %p94, %s95, %s96
      %p100 = pneg %p94
      %p101 = scmp.eq.s32.totalorder %s10, 1
      %p102 = por %p100, %p101
      %p103 = scmp.ne.s32.totalorder %s95, %s98
      %p104 = scmp.eq.s32.totalorder %s10, 0
      %p105 = por %p103, %p104
      %p106 = scmp.ne.s32.totalorder %s95, %s98
      %p107 = scmp.eq.s32.totalorder %s15, 1
      %p108 = por %p106, %p107
      %p109 = scmp.ne.s32.totalorder %s98, %s99
      %p110 = scmp.eq.s32.totalorder %s15, 0
      %p111 = por %p109, %p110
      %p112 = scmp.ne.s32.totalorder %s98, %s99
      %p113 = scmp.eq.s32.totalorder %s16, 1
      %p114 = por %p112, %p113
      %p116 = scmp.ne.s32.totalorder %s99, %s115
      %p117 = scmp.eq.s32.totalorder %s16, 0
      %p118 = por %p116, %p117
      %s119 = ssub.s32 %s17, %s36
      %s120 = ssub.s32 %s18, %s32
      %s121 = sor.u32 %s119, %s120
      %p122 = scmp.eq.s32.totalorder %s121, 0
      %s124 = sadd.s32 %s123, 1
      %s125 = scalar_select %p122, %s123, %s124
      %p128 = pneg %p122
      %p129 = scmp.eq.s32.totalorder %s10, 1
      %p130 = por %p128, %p129
      %p131 = scmp.ne.s32.totalorder %s123, %s126
      %p132 = scmp.eq.s32.totalorder %s10, 0
      %p133 = por %p131, %p132
      %p134 = scmp.ne.s32.totalorder %s123, %s126
      %p135 = scmp.eq.s32.totalorder %s15, 1
      %p136 = por %p134, %p135
      %p137 = scmp.ne.s32.totalorder %s126, %s127
      %p138 = scmp.eq.s32.totalorder %s15, 0
      %p139 = por %p137, %p138
      %p140 = scmp.ne.s32.totalorder %s126, %s127
      %p141 = scmp.eq.s32.totalorder %s16, 1
      %p142 = por %p140, %p141
      %p144 = scmp.ne.s32.totalorder %s127, %s143
      %p145 = scmp.eq.s32.totalorder %s16, 0
      %p146 = por %p144, %p145
      %p147 = scmp.le.s32.totalorder 1, %s10
      %p148 = scmp.lt.s32.totalorder %s10, 3
      %p149 = pnand %p147, %p148
      %p150 = pneg %p149
      // Predicated region
      $region9: #{linear_forward_prepared.1} parent=5 // pred_check
        _
      $region10: #{linear_forward_prepared.1} parent=5 // pred_check_branch
        %152 = sbr.rel (%p149) target = $region12
      $region11: #{linear_forward_prepared.1} parent=5 // pred_region
        %s153 = ssub.s32 %s10, 1
        // Predicated region
        $region13: #{linear_forward_prepared.1} parent=11 // pred_check
          %p154 = pneg %p85
        $region14: #{linear_forward_prepared.1} parent=11 // pred_check_branch
          %156 = sbr.rel (%p154) target = $region16
        $region15: #{linear_forward_prepared.1} parent=11 // pred_region
          %s157 = smul.u32 16, %s22
          %s159 = ssub.s32 2048, 2048
          %160 = vsyncadd [#allocation3], %s159
          %s161 = sadd.s32 %s21, %s157
          %s162 = smul.addr %s161, 128
          %s163 = scalar_lea.hbm %s1, %s162
          %s164 = sshll.u32 [#allocation2], 4
          %s165 = int_to_ptr.vmem [resolvable:$true] %s164
          %170 = dma.hbm_to_vmem [thread:$0]  %s163, 2048, %s165, [#allocation3], 128, 128, 8
        $region16: #{linear_forward_prepared.1} parent=11 // pred_fallthru
          _
        // Predicated region
        $region17: #{linear_forward_prepared.1} parent=11 // pred_check
          %p171 = pneg %p111
        $region18: #{linear_forward_prepared.1} parent=11 // pred_check_branch
          %173 = sbr.rel (%p171) target = $region20
        $region19: #{linear_forward_prepared.1} parent=11 // pred_region
          %p174 = scmp.lt.s32.totalorder %s21, 0
          %s175 = scalar_select %p174, %s21, 0
          %s176 = scalar_lea.vmem %s2, %s175
        $region20: #{linear_forward_prepared.1} parent=11 // pred_fallthru
          _
      $region12: #{linear_forward_prepared.1} parent=5 // pred_fallthru
        _
      %p177 = scmp.lt.s32.totalorder %s10, 2
      // Predicated region
      $region21: #{linear_forward_prepared.1} parent=5 // pred_check
        %p178 = pneg %p177
      $region22: #{linear_forward_prepared.1} parent=5 // pred_check_branch
        %180 = sbr.rel (%p178) target = $region24
      $region23: #{linear_forward_prepared.1} parent=5 // pred_region
        // Predicated region
        $region25: #{linear_forward_prepared.1} parent=23 // pred_check
          %p181 = pneg %p51
        $region26: #{linear_forward_prepared.1} parent=23 // pred_check_branch
          %183 = sbr.rel (%p181) target = $region28
        $region27: #{linear_forward_prepared.1} parent=23 // pred_region
          %s184 = smul.u32 2, %s17
          %p185 = scmp.lt.s32.totalorder %s184, 3
          %s186 = scalar_select %p185, %s184, 3
          %p187 = scmp.lt.s32.totalorder %s19, 0
          %s188 = scalar_select %p187, %s19, 0
          %s189 = sadd.s32 %s188, %s186
          %s190 = smul.addr %s189, 8
          %s191 = scalar_lea.vmem %s0, %s190
          %s192 = smul.u32 2, %s17
        $region28: #{linear_forward_prepared.1} parent=23 // pred_fallthru
          _
      $region24: #{linear_forward_prepared.1} parent=5 // pred_fallthru
        _
      %p193 = scmp.le.s32.totalorder 1, %s10
      %p194 = scmp.lt.s32.totalorder %s10, 3
      %p195 = pnand %p193, %p194
      %p196 = pneg %p195
      // Predicated region
      $region29: #{linear_forward_prepared.1} parent=5 // pred_check
        _
      $region30: #{linear_forward_prepared.1} parent=5 // pred_check_branch
        %198 = sbr.rel (%p195) target = $region32
      $region31: #{linear_forward_prepared.1} parent=5 // pred_region
        %s199 = ssub.s32 %s10, 1
        // Predicated region
        $region33: #{linear_forward_prepared.1} parent=31 // pred_check
          %p200 = pneg %p85
        $region34: #{linear_forward_prepared.1} parent=31 // pred_check_branch
          %202 = sbr.rel (%p200) target = $region36
        $region35: #{linear_forward_prepared.1} parent=31 // pred_region
          %203 = dma.done [#allocation3], 2048
        $region36: #{linear_forward_prepared.1} parent=31 // pred_fallthru
          _
        %s204 = smul.u32 2, %s20
        %p205 = scmp.lt.s32.totalorder %s204, 3
        %s206 = scalar_select %p205, %s204, 3
        %p207 = scmp.lt.s32.totalorder %s22, 0
        %s208 = scalar_select %p207, %s22, 0
        %s209 = sadd.s32 %s208, %s206
        %s210 = smul.addr %s209, 8
        %s211 = scalar_lea.vmem %s0, %s210
        %p212 = pneg %p57
        %p213 = pneg %p54
        %p214 = pneg %p85
        %p215 = pneg %p82
        %p216 = scmp.lt.s32.totalorder %s21, 0
        %s217 = scalar_select %p216, %s21, 0
        %s218 = scalar_lea.vmem %s2, %s217
        %p219 = pneg %p111
        %p220 = pneg %p108
        %p221 = pneg %p139
        %p222 = pneg %p136
        %s223 = smul.u32 2, %s20
        %p224 = scmp.lt.s32.totalorder %s223, 3
        %s225 = scalar_select %p224, %s223, 3
        %p226 = scmp.lt.s32.totalorder %s21, 0
        %s227 = scalar_select %p226, %s21, 0
        %s228 = sadd.s32 %s227, %s225
        %s229 = smul.addr %s228, 8
        %s230 = scalar_lea.vmem %s3, %s229
        %s231 = smul.u32 2, %s20
        %p232 = scmp.lt.s32.totalorder %s231, 3
        %s233 = scalar_select %p232, %s231, 3
        %p234 = scmp.lt.s32.totalorder %s22, 0
        %s235 = scalar_select %p234, %s22, 0
        %s236 = sadd.s32 %s235, %s233
        %s237 = smul.addr %s236, 8
        %s238 = scalar_lea.vmem %s0, %s237
        %s239 = smul.u32 2, %s20
        %s240 = smul.u32 16, %s22
        %p241 = scmp.lt.s32.totalorder %s21, 0
        %s242 = scalar_select %p241, %s21, 0
        %s243 = scalar_lea.vmem %s2, %s242
        %s244 = smul.u32 2, %s20
        %p245 = scmp.lt.s32.totalorder %s244, 3
        %s246 = scalar_select %p245, %s244, 3
        %p247 = scmp.lt.s32.totalorder %s21, 0
        %s248 = scalar_select %p247, %s21, 0
        %s249 = sadd.s32 %s248, %s246
        %s250 = smul.addr %s249, 8
        %s251 = scalar_lea.vmem %s3, %s250
        %s252 = smul.u32 2, %s20
        %p253 = scmp.eq.s32.totalorder %s22, 0
        // Predicated region
        $region37: #{linear_forward_prepared.1} parent=31 // pred_check
          %p254 = pneg %p253
        $region38: #{linear_forward_prepared.1} parent=31 // pred_check_branch
          %256 = sbr.rel (%p254) target = $region40
        $region39: #{linear_forward_prepared.1} parent=31 // pred_region
          %v257 = vld [vmem:[%s243] sm:$0x1]
          %v259 = vlaneseq
          %v260 = vshrl.u32 %v259, 7
          %v261 = vsub.s32 0, %v260
          %v262 = vrot.slane %v257, %v261
          %264 = vst [vmem:[%s251] sm:$0xff] %v262
          %265 = vst [vmem:[%s251 + $0x8] sm:$0xff] %v262
        $region40: #{linear_forward_prepared.1} parent=31 // pred_fallthru
          _
        %v266 = vld [vmem:[%s251] sm:$0xff]
        %v267 = vld [vmem:[%s251 + $0x8] sm:$0xff]
        %v268 = vld [vmem:[%s238] sm:$0xff]
        %v269 = vld [vmem:[%s238 + $0x8] sm:$0xff]
        %v270 = vld [vmem:[#allocation2] sm:$0xff]
        %v271 = vld [vmem:[#allocation2 + $0x8] sm:$0xff]
        %v272 = vld [vmem:[#allocation2 + $0x10] sm:$0xff]
        %v273 = vld [vmem:[#allocation2 + $0x18] sm:$0xff]
        %v274 = vld [vmem:[#allocation2 + $0x20] sm:$0xff]
        %v275 = vld [vmem:[#allocation2 + $0x28] sm:$0xff]
        %v276 = vld [vmem:[#allocation2 + $0x30] sm:$0xff]
        %v277 = vld [vmem:[#allocation2 + $0x38] sm:$0xff]
        %v278 = vld [vmem:[#allocation2 + $0x40] sm:$0xff]
        %v279 = vld [vmem:[#allocation2 + $0x48] sm:$0xff]
        %v280 = vld [vmem:[#allocation2 + $0x50] sm:$0xff]
        %v281 = vld [vmem:[#allocation2 + $0x58] sm:$0xff]
        %v282 = vld [vmem:[#allocation2 + $0x60] sm:$0xff]
        %v283 = vld [vmem:[#allocation2 + $0x68] sm:$0xff]
        %v284 = vld [vmem:[#allocation2 + $0x70] sm:$0xff]
        %v285 = vld [vmem:[#allocation2 + $0x78] sm:$0xff]
        %286 = vmatprep.subr.mxu0 0.0
        %287 = vmatpush1.msra.mxu0 %v270
        %288 = vmatprep.subr.mxu0 0.0
        %289 = vmatpush1.msra.mxu0 %v271
        %290 = vmatprep.subr.mxu0 0.0
        %291 = vmatpush1.msra.mxu0 %v272
        %292 = vmatprep.subr.mxu0 0.0
        %293 = vmatpush1.msra.mxu0 %v273
        %294 = vmatprep.subr.mxu0 0.0
        %295 = vmatpush1.msra.mxu0 %v274
        %296 = vmatprep.subr.mxu0 0.0
        %297 = vmatpush1.msra.mxu0 %v275
        %298 = vmatprep.subr.mxu0 0.0
        %299 = vmatpush1.msra.mxu0 %v276
        %300 = vmatprep.subr.mxu0 0.0
        %301 = vmatpush1.msra.mxu0 %v277
        %302 = vmatprep.subr.mxu0 0.0
        %303 = vmatpush1.msra.mxu0 %v278
        %304 = vmatprep.subr.mxu0 0.0
        %305 = vmatpush1.msra.mxu0 %v279
        %306 = vmatprep.subr.mxu0 0.0
        %307 = vmatpush1.msra.mxu0 %v280
        %308 = vmatprep.subr.mxu0 0.0
        %309 = vmatpush1.msra.mxu0 %v281
        %310 = vmatprep.subr.mxu0 0.0
        %311 = vmatpush1.msra.mxu0 %v282
        %312 = vmatprep.subr.mxu0 0.0
        %313 = vmatpush1.msra.mxu0 %v283
        %314 = vmatprep.subr.mxu0 0.0
        %315 = vmatpush1.msra.mxu0 %v284
        %316 = vmatprep.subr.mxu0 0.0
        %317 = vmatpush1.msra.mxu0 %v285
        %318 = vmatprep.subr.mxu0 0.0
        %319 = vmatpush1.msra.mxu0 0.0
        %320 = vmatprep.subr.mxu0 0.0
        %321 = vmatpush1.msra.mxu0 0.0
        %322 = vmatprep.subr.mxu0 0.0
        %323 = vmatpush1.msra.mxu0 0.0
        %324 = vmatprep.subr.mxu0 0.0
        %325 = vmatpush1.msra.mxu0 0.0
        %326 = vmatprep.subr.mxu0 0.0
        %327 = vmatpush1.msra.mxu0 0.0
        %328 = vmatprep.subr.mxu0 0.0
        %329 = vmatpush1.msra.mxu0 0.0
        %330 = vmatprep.subr.mxu0 0.0
        %331 = vmatpush1.msra.mxu0 0.0
        %332 = vmatprep.subr.mxu0 0.0
        %333 = vmatpush1.msra.mxu0 0.0
        %334 = vmatprep.subr.mxu0 0.0
        %335 = vmatpush1.msra.mxu0 0.0
        %336 = vmatprep.subr.mxu0 0.0
        %337 = vmatpush1.msra.mxu0 0.0
        %338 = vmatprep.subr.mxu0 0.0
        %339 = vmatpush1.msra.mxu0 0.0
        %340 = vmatprep.subr.mxu0 0.0
        %341 = vmatpush1.msra.mxu0 0.0
        %342 = vmatprep.subr.mxu0 0.0
        %343 = vmatpush1.msra.mxu0 0.0
        %344 = vmatprep.subr.mxu0 0.0
        %345 = vmatpush1.msra.mxu0 0.0
        %346 = vmatprep.subr.mxu0 0.0
        %347 = vmatpush1.msra.mxu0 0.0
        %348 = vmatprep.subr.mxu0 0.0
        %349 = vmatpush1.msra.mxu0 0.0
        %350 = vmatprep.mubr.f32.mxu0 0.0
        %351 = vmatmul.mubr.f32.gmra.mrb[0].mxu0 %v268
        %v352 = vpop.f32.mrb[0].mxu0
        %v353 = vadd.f32 0.0, %v352
        %v354 = vpop.f32.mrb[0].mxu0
        %355 = vmatprep.mubr.f32.mxu0 0.0
        %356 = vmatmul.mubr.f32.gmra.mrb[0].mxu0 %v269
        %v357 = vpop.f32.mrb[0].mxu0
        %v358 = vadd.f32 0.0, %v357
        %v359 = vpop.f32.mrb[0].mxu0
        %360 = vdwg.mxu0
        %v361 = vadd.f32 %v266, %v353
        %v362 = vadd.f32 %v267, %v358
        %363 = vst [vmem:[%s251] sm:$0xff] %v361
        %364 = vst [vmem:[%s251 + $0x8] sm:$0xff] %v362
        %s365 = smul.u32 2, %s20
        %p366 = scmp.lt.s32.totalorder %s365, 3
        %s367 = scalar_select %p366, %s365, 3
        %p368 = scmp.lt.s32.totalorder %s21, 0
        %s369 = scalar_select %p368, %s21, 0
        %s370 = sadd.s32 %s369, %s367
        %s371 = smul.addr %s370, 8
        %s372 = scalar_lea.vmem %s3, %s371
        // Predicated region
        $region41: #{linear_forward_prepared.1} parent=31 // pred_check
          %p373 = pneg %p136
        $region42: #{linear_forward_prepared.1} parent=31 // pred_check_branch
          %375 = sbr.rel (%p373) target = $region44
        $region43: #{linear_forward_prepared.1} parent=31 // pred_region
          %s376 = smul.u32 2, %s20
        $region44: #{linear_forward_prepared.1} parent=31 // pred_fallthru
          _
      $region32: #{linear_forward_prepared.1} parent=5 // pred_fallthru
        _
      %p377 = scmp.le.s32.totalorder 2, %s10
      // Predicated region
      $region45: #{linear_forward_prepared.1} parent=5 // pred_check
        %p378 = pneg %p377
      $region46: #{linear_forward_prepared.1} parent=5 // pred_check_branch
        %380 = sbr.rel (%p378) target = $region48
      $region47: #{linear_forward_prepared.1} parent=5 // pred_region
        %s381 = ssub.s32 %s10, 2
        // Predicated region
        $region49: #{linear_forward_prepared.1} parent=47 // pred_check
          %p382 = pneg %p142
        $region50: #{linear_forward_prepared.1} parent=47 // pred_check_branch
          %384 = sbr.rel (%p382) target = $region52
        $region51: #{linear_forward_prepared.1} parent=47 // pred_region
          %s385 = smul.u32 2, %s23
          %p386 = scmp.lt.s32.totalorder %s385, 3
          %s387 = scalar_select %p386, %s385, 3
          %p388 = scmp.lt.s32.totalorder %s24, 0
          %s389 = scalar_select %p388, %s24, 0
          %s390 = sadd.s32 %s389, %s387
          %s391 = smul.addr %s390, 8
          %s392 = scalar_lea.vmem %s3, %s391
        $region52: #{linear_forward_prepared.1} parent=47 // pred_fallthru
          _
      $region48: #{linear_forward_prepared.1} parent=5 // pred_fallthru
        _
    $region6: #{linear_forward_prepared.1} parent=1 // loop_footer
      %s14 = sadd.s32 1, %s10
    $region7: #{linear_forward_prepared.1} parent=1 // loop_footer_branch
      %9 = sbr.rel target = $region3
    $region8: #{linear_forward_prepared.1} parent=1 // loop_exit
      _
    %393 = vsyncpa [#allocation3], 1
    %s394 = scalar_lea.sflag [#allocation3], 1
    %395 = vsyncpa %s394, 1

</llo_original>
